<compile_context>
chip_gen: v7x
topology: tpu7x:2x2x1
jax: 0.10.0
libtpu: 0.0.40
codegen_flags: <defaults>
</compile_context>

<pallas_src>
import jax
import jax.numpy as jnp
import numpy as np
from jax import lax
from jax.experimental import pallas as pl
from jax.experimental.pallas import tpu as pltpu

BN_EPS = 1e-5


def _round_up(x, m):
    return (x + m - 1) // m * m


# ---------------------------------------------------------------------------
# Kernels
# ---------------------------------------------------------------------------
def conv_stats_kernel(p_ref, w_ref, sum_ref, sumsq_ref):
    """Pass 1: conv tile (MXU) -> per-tile per-channel sum and sum-of-squares.

    p_ref:     (TM, Kp)     f32  im2col patch tile
    w_ref:     (Kp, Cpad)   f32  conv weight (zero-padded to 128 lanes)
    sum_ref:   (1, 1, Cpad) f32  per-tile channel sum
    sumsq_ref: (1, 1, Cpad) f32  per-tile channel sum of squares
    """
    conv = jnp.dot(p_ref[...], w_ref[...], preferred_element_type=jnp.float32)
    s = jnp.sum(conv, axis=0, keepdims=True)           # (1, Cpad)
    sq = jnp.sum(conv * conv, axis=0, keepdims=True)   # (1, Cpad)
    sum_ref[...] = s[None]
    sumsq_ref[...] = sq[None]


def conv_bn_relu_kernel(p_ref, w_ref, scale_ref, shift_ref, o_ref):
    """Pass 2: recompute conv tile, apply folded BN scale/shift + ReLU.

    scale_ref/shift_ref: (1, Cpad) f32  folded gamma*inv_std / beta - mean*gamma*inv_std
    o_ref:               (TM, Cpad) f32 lane-dense output tile
    """
    conv = jnp.dot(p_ref[...], w_ref[...], preferred_element_type=jnp.float32)
    o_ref[...] = jnp.maximum(conv * scale_ref[...] + shift_ref[...], 0.0)


# ---------------------------------------------------------------------------
# Wrapper
# ---------------------------------------------------------------------------
def _im2col_nchw(x, kh, kw):
    """x: (N, Cin, H, W) -> patches (N*H*W, Cin*kh*kw), 'same' padding, stride 1.

    K-index ordering is ci*kh*kw + dy*kw + dx, matching
    torch_weight.reshape(Cout, -1) row-major flattening of (Cin, kh, kw).
    """
    N, Cin, H, W = x.shape
    ph, pw = (kh - 1) // 2, (kw - 1) // 2
    xp = jnp.pad(x, ((0, 0), (0, 0), (ph, ph), (pw, pw)))
    cols = []
    for dy in range(kh):
        for dx in range(kw):
            cols.append(xp[:, :, dy:dy + H, dx:dx + W])        # (N, Cin, H, W)
    patches = jnp.stack(cols, axis=2)                          # (N, Cin, kh*kw, H, W)
    patches = patches.transpose(0, 3, 4, 1, 2)                 # (N, H, W, Cin, kh*kw)
    return patches.reshape(N * H * W, Cin * kh * kw)


def conv_brunch_forward(x, weight, bias, gamma, beta, *, block_m=256):
    """ConvBrunch forward. x: (N, Cin, H, W) f32. weight: (Cout, Cin, kh, kw)."""
    N, Cin, H, W = x.shape
    Cout, _, kh, kw = weight.shape
    M = N * H * W
    K = Cin * kh * kw

    # Per-channel conv bias is exactly cancelled by training-mode BN mean
    # subtraction -> drop it (no DMA, no VPU add).
    del bias

    Cpad = _round_up(Cout, 128)          # lane-dense channels
    Kp = _round_up(K, 8)                 # sublane-aligned contraction dim
    tm = min(block_m, _round_up(M, 8))   # rows per grid step (multiple of 8)
    Mp = _round_up(M, tm)
    grid = (Mp // tm,)

    patches = _im2col_nchw(x.astype(jnp.float32), kh, kw)      # (M, K)
    # Zero row/K padding is harmless: zero patch rows -> conv 0 -> contribute 0
    # to sum and sum-of-squares (we divide by the true M), and padded output
    # rows/channels are sliced off below.
    patches = jnp.pad(patches, ((0, Mp - M), (0, Kp - K)))

    w2d = jnp.zeros((Kp, Cpad), jnp.float32).at[:K, :Cout].set(
        weight.reshape(Cout, K).T.astype(jnp.float32))
    gamma_p = jnp.zeros((Cpad,), jnp.float32).at[:Cout].set(gamma.astype(jnp.float32))
    beta_p = jnp.zeros((Cpad,), jnp.float32).at[:Cout].set(beta.astype(jnp.float32))

    compiler_params = pltpu.CompilerParams(
        dimension_semantics=("parallel",),        # independent M tiles (v7x 2-TC)
        vmem_limit_bytes=32 * 1024 * 1024,
    )
    matmul_flops = 2 * Mp * Kp * Cpad

    # ---- Pass 1: per-tile partial channel statistics -----------------------
    psum, psumsq = pl.pallas_call(
        conv_stats_kernel,
        out_shape=(jax.ShapeDtypeStruct((grid[0], 1, Cpad), jnp.float32),
                   jax.ShapeDtypeStruct((grid[0], 1, Cpad), jnp.float32)),
        grid=grid,
        in_specs=[
            pl.BlockSpec((tm, Kp), lambda i: (i, 0)),
            pl.BlockSpec((Kp, Cpad), lambda i: (0, 0)),
        ],
        out_specs=(
            pl.BlockSpec((1, 1, Cpad), lambda i: (i, 0, 0)),
            pl.BlockSpec((1, 1, Cpad), lambda i: (i, 0, 0)),
        ),
        compiler_params=compiler_params,
        cost_estimate=pl.CostEstimate(
            flops=matmul_flops + 3 * Mp * Cpad,
            transcendentals=0,
            bytes_accessed=4 * (Mp * Kp + Kp * Cpad + 2 * grid[0] * Cpad)),
    )(patches, w2d)

    # ---- Combine tiny (G, Cpad) partials; fold BN into scale/shift ---------
    ch_sum = jnp.sum(psum, axis=(0, 1))                 # (Cpad,)
    ch_sumsq = jnp.sum(psumsq, axis=(0, 1))             # (Cpad,)
    mean = ch_sum / M
    var = jnp.maximum(ch_sumsq / M - mean * mean, 0.0)  # biased var (PyTorch training BN)
    inv_std = lax.rsqrt(var + BN_EPS)
    scale = (gamma_p * inv_std).reshape(1, Cpad)
    shift = (beta_p - mean * gamma_p * inv_std).reshape(1, Cpad)

    # ---- Pass 2: normalize + ReLU, lane-dense output ------------------------
    out_flat = pl.pallas_call(
        conv_bn_relu_kernel,
        out_shape=jax.ShapeDtypeStruct((Mp, Cpad), jnp.float32),
        grid=grid,
        in_specs=[
            pl.BlockSpec((tm, Kp), lambda i: (i, 0)),
            pl.BlockSpec((Kp, Cpad), lambda i: (0, 0)),
            pl.BlockSpec((1, Cpad), lambda i: (0, 0)),
            pl.BlockSpec((1, Cpad), lambda i: (0, 0)),
        ],
        out_specs=pl.BlockSpec((tm, Cpad), lambda i: (i, 0)),
        compiler_params=compiler_params,
        cost_estimate=pl.CostEstimate(
            flops=matmul_flops + 3 * Mp * Cpad,
            transcendentals=0,
            bytes_accessed=4 * (Mp * Kp + Kp * Cpad + 2 * Cpad + Mp * Cpad)),
    )(patches, w2d, scale, shift)

    # (Mp, Cpad) -> slice padding -> (N, H, W, Cout) -> NCHW to match the module.
    out = out_flat[:M, :Cout].reshape(N, H, W, Cout)
    return out.transpose(0, 3, 1, 2)


# ---------------------------------------------------------------------------
# Pure-JAX reference (PyTorch training-mode forward, bias included)
# ---------------------------------------------------------------------------
def _reference_forward(x, weight, bias, gamma, beta):
    conv = lax.conv_general_dilated(
        x, weight, window_strides=(1, 1), padding="SAME",
        dimension_numbers=("NCHW", "OIHW", "NCHW"))
    conv = conv + bias.reshape(1, -1, 1, 1)
    mean = jnp.mean(conv, axis=(0, 2, 3), keepdims=True)
    var = jnp.mean((conv - mean) ** 2, axis=(0, 2, 3), keepdims=True)
    y = (conv - mean) * lax.rsqrt(var + BN_EPS)
    y = y * gamma.reshape(1, -1, 1, 1) + beta.reshape(1, -1, 1, 1)
    return jnp.maximum(y, 0.0)


if __name__ == "__main__":
    # Small shapes consistent with the module: batch=2, in_planes=4,
    # out_planes=8, spatial 16x16, kernel_size=3 (padding=1).
    N, Cin, H, W = 2, 4, 16, 16
    Cout, ksize = 8, 3

    key = jax.random.PRNGKey(0)
    kx, kw, kb = jax.random.split(key, 3)

    x = jax.random.normal(kx, (N, Cin, H, W), dtype=jnp.float32)
    weight = 0.1 * jax.random.normal(kw, (Cout, Cin, ksize, ksize), dtype=jnp.float32)
    bias = 0.05 * jax.random.normal(kb, (Cout,), dtype=jnp.float32)
    gamma = jnp.ones((Cout,), dtype=jnp.float32)   # BatchNorm2d default init
    beta = jnp.zeros((Cout,), dtype=jnp.float32)   # BatchNorm2d default init

    out = conv_brunch_forward(x, weight, bias, gamma, beta)
    out = jax.block_until_ready(out)

    ref = jax.block_until_ready(_reference_forward(x, weight, bias, gamma, beta))
    np.testing.assert_allclose(np.asarray(out), np.asarray(ref), rtol=1e-4, atol=1e-4)

    print("KERNEL_OK")
</pallas_src>

<mosaic_0001>
module attributes {stable_mosaic.version = 11 : i64} {
  func.func @conv_stats_kernel(%arg0: i32, %arg1: memref<256x40xf32, #tpu.memory_space<vmem>>, %arg2: memref<40x128xf32, #tpu.memory_space<vmem>>, %arg3: memref<1x1x128xf32, #tpu.memory_space<vmem>>, %arg4: memref<1x1x128xf32, #tpu.memory_space<vmem>>) attributes {dimension_semantics = [#tpu.dimension_semantics<parallel>], iteration_bounds = array<i64: 2>, scalar_prefetch = 0 : i64, scratch_operands = 0 : i64, tpu.core_type = #tpu.core_type<tc>, window_params = [{transform_indices = @transform_0, window_bounds = array<i64: 256, 40>}, {pipeline_mode = #tpu.pipeline_mode<synchronous>, transform_indices = @transform_1, window_bounds = array<i64: 40, 128>}, {transform_indices = @transform_2, window_bounds = array<i64: 1, 1, 128>}, {transform_indices = @transform_3, window_bounds = array<i64: 1, 1, 128>}]} {
    %c0 = arith.constant 0 : index
    %c0_0 = arith.constant 0 : index
    %0 = vector.load %arg1[%c0, %c0_0] : memref<256x40xf32, #tpu.memory_space<vmem>>, vector<256x40xf32>
    %c0_1 = arith.constant 0 : index
    %c0_2 = arith.constant 0 : index
    %1 = vector.load %arg2[%c0_1, %c0_2] : memref<40x128xf32, #tpu.memory_space<vmem>>, vector<40x128xf32>
    %cst = arith.constant dense<0.000000e+00> : vector<256x128xf32>
    %2 = tpu.matmul %0, %1, %cst {dimension_numbers = #tpu.dot_dimension_numbers<[1], [0], [0], [1], [0, 0, 1, 1], [], []>} : vector<256x40xf32>, vector<40x128xf32>, vector<256x128xf32> -> vector<256x128xf32>
    %cst_3 = arith.constant dense<0.000000e+00> : vector<128xf32>
    %3 = vector.multi_reduction <add>, %2, %cst_3 [0] : vector<256x128xf32> to vector<128xf32>
    %4 = vector.shape_cast %3 : vector<128xf32> to vector<1x128xf32>
    %5 = arith.mulf %2, %2 : vector<256x128xf32>
    %cst_4 = arith.constant dense<0.000000e+00> : vector<128xf32>
    %6 = vector.multi_reduction <add>, %5, %cst_4 [0] : vector<256x128xf32> to vector<128xf32>
    %7 = vector.shape_cast %6 : vector<128xf32> to vector<1x128xf32>
    %8 = vector.shape_cast %4 : vector<1x128xf32> to vector<1x1x128xf32>
    %c0_5 = arith.constant 0 : index
    %c0_6 = arith.constant 0 : index
    %c0_7 = arith.constant 0 : index
    %9 = vector.load %arg3[%c0_5, %c0_6, %c0_7] : memref<1x1x128xf32, #tpu.memory_space<vmem>>, vector<1x1x128xf32>
    tpu.vector_store %arg3[%c0_5, %c0_6, %c0_7], %8 {strides = array<i32>} : memref<1x1x128xf32, #tpu.memory_space<vmem>>, vector<1x1x128xf32>,
    %10 = vector.shape_cast %7 : vector<1x128xf32> to vector<1x1x128xf32>
    %c0_8 = arith.constant 0 : index
    %c0_9 = arith.constant 0 : index
    %c0_10 = arith.constant 0 : index
    %11 = vector.load %arg4[%c0_8, %c0_9, %c0_10] : memref<1x1x128xf32, #tpu.memory_space<vmem>>, vector<1x1x128xf32>
    tpu.vector_store %arg4[%c0_8, %c0_9, %c0_10], %10 {strides = array<i32>} : memref<1x1x128xf32, #tpu.memory_space<vmem>>, vector<1x1x128xf32>,
    return
  }
  func.func @transform_0(%arg0: i32) -> (i32, i32) {
    %c0_i32 = arith.constant 0 : i32
    %c0_i32_0 = arith.constant 0 : i32
    return %arg0, %c0_i32 : i32, i32
  }
  func.func @transform_1(%arg0: i32) -> (i32, i32) {
    %c0_i32 = arith.constant 0 : i32
    %c0_i32_0 = arith.constant 0 : i32
    %c0_i32_1 = arith.constant 0 : i32
    return %c0_i32, %c0_i32_0 : i32, i32
  }
  func.func @transform_2(%arg0: i32) -> (i32, i32, i32) {
    %c0_i32 = arith.constant 0 : i32
    %c0_i32_0 = arith.constant 0 : i32
    %c0_i32_1 = arith.constant 0 : i32
    return %arg0, %c0_i32, %c0_i32_0 : i32, i32, i32
  }
  func.func @transform_3(%arg0: i32) -> (i32, i32, i32) {
    %c0_i32 = arith.constant 0 : i32
    %c0_i32_0 = arith.constant 0 : i32
    %c0_i32_1 = arith.constant 0 : i32
    return %arg0, %c0_i32, %c0_i32_0 : i32, i32, i32
  }
}

</mosaic_0001>

<llo_original>
// kernel: tpu_custom_call.1
$region0: #{tpu_custom_call.1}
  #allocation0 [shape = 'u32[]', space=smem, size = 0x4, offset = 0x4, fixed_abs, tag = 'smem constant byte address 0x4 - core index']
  #allocation1 [shape = 'u32[144,128]{1,0:T(1,128)}', space=vmem, size = 0x12000, scoped, tag = 'internal scratch']
  %s0 = inlined_call_operand.vmem [shape: f32[512,40], index: 0, kind: input, shape index: {}]
  %s1 = inlined_call_operand.vmem [shape: f32[40,128], index: 1, kind: input, shape index: {}]
  %s2 = inlined_call_operand.hbm [shape: f32[2,1,128], index: 2, kind: output, shape index: {0}]
  %s3 = inlined_call_operand.hbm [shape: f32[2,1,128], index: 3, kind: output, shape index: {1}]
  %4 = xla_tuple %s2, %s3
  %s5 = sld [smem:[#allocation0]]
  $region49: #{tpu_custom_call.1} parent=0
    _
  %s7 = ssub.s32 1, %s5
  %s8 = scalar_select 0, %s7, %s5
  $region1: #{tpu_custom_call.1} parent=0
    #allocation2 [shape = 'u8[1024]{0}', space=vmem, size = 0x400, scoped, tag = 'output window, operand 0']
    #allocation3 [shape = 's32[2]{0}', space=sflag, size = 0x8, scoped, tag = 'scoped memory for tpu_custom_call.1']
    #allocation4 [shape = 'u8[1024]{0}', space=vmem, size = 0x400, scoped, tag = 'output window, operand 1']
    #allocation5 [shape = 's32[2]{0}', space=sflag, size = 0x8, scoped, tag = 'scoped memory for tpu_custom_call.1']
    %9 = vsyncpa [#allocation3], 0
    %s10 = scalar_lea.sflag [#allocation3], 1
    %11 = vsyncpa %s10, 0
    %12 = vsyncpa [#allocation5], 0
    %s13 = scalar_lea.sflag [#allocation5], 1
    %14 = vsyncpa %s13, 0
    loop: start=0, step=1, limit=4
    $region2: #{tpu_custom_call.1} parent=1 // loop_pre_header
      _
    $region3: #{tpu_custom_call.1} parent=1 // loop_header
      %s16 = sphi 0, %s20
      %p17 = scmp.ge.s32.totalorder %s16, 4
      %s26 = sphi 0, %s28
      %s29 = sphi 0, %s26
      %s30 = sphi 0, %s29
      %s46 = sphi 0, %s30
      %s50 = sphi 0, %s50
      %s52 = sphi 0, %s50
      %s53 = sphi 0, %s52
      %s67 = sphi 0, %s53
      %s73 = sphi 0, %s75
      %s76 = sphi 0, %s73
      %s77 = sphi 0, %s76
      %s93 = sphi 0, %s77
      %s99 = sphi 0, %s101
      %s102 = sphi 0, %s99
      %s103 = sphi 0, %s102
      %s119 = sphi 0, %s103
    $region4: #{tpu_custom_call.1} parent=1 // loop_header_branch
      %19 = sbr.rel (%p17) target = $region8
    $region5: #{tpu_custom_call.1} parent=1 // loop_body
      %s21 = ssub.s32 %s16, 1
      %s22 = ssub.s32 %s16, 2
      %s23 = sadd.s32 %s16, 1
      %s24 = ssub.s32 %s16, %s23
      %p25 = scmp.eq.s32.totalorder %s24, 0
      %s27 = sadd.s32 %s26, 1
      %s28 = scalar_select %p25, %s26, %s27
      %p31 = pneg %p25
      %p32 = scmp.eq.s32.totalorder %s16, 1
      %p33 = por %p31, %p32
      %p34 = scmp.ne.s32.totalorder %s26, %s29
      %p35 = scmp.eq.s32.totalorder %s16, 0
      %p36 = por %p34, %p35
      %p37 = scmp.ne.s32.totalorder %s26, %s29
      %p38 = scmp.eq.s32.totalorder %s21, 1
      %p39 = por %p37, %p38
      %p40 = scmp.ne.s32.totalorder %s29, %s30
      %p41 = scmp.eq.s32.totalorder %s21, 0
      %p42 = por %p40, %p41
      %p43 = scmp.ne.s32.totalorder %s29, %s30
      %p44 = scmp.eq.s32.totalorder %s22, 1
      %p45 = por %p43, %p44
      %p47 = scmp.ne.s32.totalorder %s30, %s46
      %p48 = scmp.eq.s32.totalorder %s22, 0
      %p49 = por %p47, %p48
      %s51 = sadd.s32 %s50, 1
      %p54 = scmp.eq.s32.totalorder %s16, 1
      %p55 = scmp.ne.s32.totalorder %s50, %s52
      %p56 = scmp.eq.s32.totalorder %s16, 0
      %p57 = por %p55, %p56
      %p58 = scmp.ne.s32.totalorder %s50, %s52
      %p59 = scmp.eq.s32.totalorder %s21, 1
      %p60 = por %p58, %p59
      %p61 = scmp.ne.s32.totalorder %s52, %s53
      %p62 = scmp.eq.s32.totalorder %s21, 0
      %p63 = por %p61, %p62
      %p64 = scmp.ne.s32.totalorder %s52, %s53
      %p65 = scmp.eq.s32.totalorder %s22, 1
      %p66 = por %p64, %p65
      %p68 = scmp.ne.s32.totalorder %s53, %s67
      %p69 = scmp.eq.s32.totalorder %s22, 0
      %p70 = por %p68, %p69
      %s71 = ssub.s32 %s16, %s23
      %p72 = scmp.eq.s32.totalorder %s71, 0
      %s74 = sadd.s32 %s73, 1
      %s75 = scalar_select %p72, %s73, %s74
      %p78 = pneg %p72
      %p79 = scmp.eq.s32.totalorder %s16, 1
      %p80 = por %p78, %p79
      %p81 = scmp.ne.s32.totalorder %s73, %s76
      %p82 = scmp.eq.s32.totalorder %s16, 0
      %p83 = por %p81, %p82
      %p84 = scmp.ne.s32.totalorder %s73, %s76
      %p85 = scmp.eq.s32.totalorder %s21, 1
      %p86 = por %p84, %p85
      %p87 = scmp.ne.s32.totalorder %s76, %s77
      %p88 = scmp.eq.s32.totalorder %s21, 0
      %p89 = por %p87, %p88
      %p90 = scmp.ne.s32.totalorder %s76, %s77
      %p91 = scmp.eq.s32.totalorder %s22, 1
      %p92 = por %p90, %p91
      %p94 = scmp.ne.s32.totalorder %s77, %s93
      %p95 = scmp.eq.s32.totalorder %s22, 0
      %p96 = por %p94, %p95
      %s97 = ssub.s32 %s16, %s23
      %p98 = scmp.eq.s32.totalorder %s97, 0
      %s100 = sadd.s32 %s99, 1
      %s101 = scalar_select %p98, %s99, %s100
      %p104 = pneg %p98
      %p105 = scmp.eq.s32.totalorder %s16, 1
      %p106 = por %p104, %p105
      %p107 = scmp.ne.s32.totalorder %s99, %s102
      %p108 = scmp.eq.s32.totalorder %s16, 0
      %p109 = por %p107, %p108
      %p110 = scmp.ne.s32.totalorder %s99, %s102
      %p111 = scmp.eq.s32.totalorder %s21, 1
      %p112 = por %p110, %p111
      %p113 = scmp.ne.s32.totalorder %s102, %s103
      %p114 = scmp.eq.s32.totalorder %s21, 0
      %p115 = por %p113, %p114
      %p116 = scmp.ne.s32.totalorder %s102, %s103
      %p117 = scmp.eq.s32.totalorder %s22, 1
      %p118 = por %p116, %p117
      %p120 = scmp.ne.s32.totalorder %s103, %s119
      %p121 = scmp.eq.s32.totalorder %s22, 0
      %p122 = por %p120, %p121
      %p123 = scmp.le.s32.totalorder 1, %s16
      %p124 = scmp.lt.s32.totalorder %s16, 3
      %p125 = pnand %p123, %p124
      %p126 = pneg %p125
      // Predicated region
      $region9: #{tpu_custom_call.1} parent=5 // pred_check
        _
      $region10: #{tpu_custom_call.1} parent=5 // pred_check_branch
        %128 = sbr.rel (%p125) target = $region12
      $region11: #{tpu_custom_call.1} parent=5 // pred_region
        %s129 = ssub.s32 %s16, 1
        // Predicated region
        $region13: #{tpu_custom_call.1} parent=11 // pred_check
          %p130 = pneg %p63
        $region14: #{tpu_custom_call.1} parent=11 // pred_check_branch
          %132 = sbr.rel (%p130) target = $region16
        $region15: #{tpu_custom_call.1} parent=11 // pred_region
          _
        $region16: #{tpu_custom_call.1} parent=11 // pred_fallthru
          _
      $region12: #{tpu_custom_call.1} parent=5 // pred_fallthru
        _
      %p133 = scmp.lt.s32.totalorder %s16, 2
      // Predicated region
      $region17: #{tpu_custom_call.1} parent=5 // pred_check
        %p134 = pneg %p133
      $region18: #{tpu_custom_call.1} parent=5 // pred_check_branch
        %136 = sbr.rel (%p134) target = $region20
      $region19: #{tpu_custom_call.1} parent=5 // pred_region
        // Predicated region
        $region21: #{tpu_custom_call.1} parent=19 // pred_check
          %p137 = pneg %p36
        $region22: #{tpu_custom_call.1} parent=19 // pred_check_branch
          %139 = sbr.rel (%p137) target = $region24
        $region23: #{tpu_custom_call.1} parent=19 // pred_region
          %s140 = smul.u32 32, %s16
          %p141 = scmp.lt.s32.totalorder %s140, 63
          %s142 = scalar_select %p141, %s140, 63
          %s143 = smul.addr %s142, 8
          %s144 = scalar_lea.vmem %s0, %s143
          %s145 = smul.u32 32, %s16
        $region24: #{tpu_custom_call.1} parent=19 // pred_fallthru
          _
      $region20: #{tpu_custom_call.1} parent=5 // pred_fallthru
        _
      %p146 = scmp.le.s32.totalorder 1, %s16
      %p147 = scmp.lt.s32.totalorder %s16, 3
      %p148 = pnand %p146, %p147
      %p149 = pneg %p148
      // Predicated region
      $region25: #{tpu_custom_call.1} parent=5 // pred_check
        _
      $region26: #{tpu_custom_call.1} parent=5 // pred_check_branch
        %151 = sbr.rel (%p148) target = $region28
      $region27: #{tpu_custom_call.1} parent=5 // pred_region
        %s152 = ssub.s32 %s16, 1
        %s153 = smul.u32 32, %s21
        %p154 = scmp.lt.s32.totalorder %s153, 63
        %s155 = scalar_select %p154, %s153, 63
        %s156 = smul.addr %s155, 8
        %s157 = scalar_lea.vmem %s0, %s156
        %p158 = pneg %p42
        %p159 = pneg %p39
        %p160 = pneg %p63
        %p161 = pneg %p60
        %p162 = pneg %p89
        %p163 = pneg %p86
        %s164 = sand.u32 %s76, 1
        %s165 = scalar_lea.sflag [#allocation3], %s164
        %s166 = sand.u32 %s76, 1
        %s167 = scalar_lea.vmem [#allocation2], %s166
        %p168 = pneg %p115
        %p169 = pneg %p112
        %s170 = sand.u32 %s102, 1
        %s171 = scalar_lea.sflag [#allocation5], %s170
        %s172 = sand.u32 %s102, 1
        %s173 = scalar_lea.vmem [#allocation4], %s172
        %s174 = smul.u32 32, %s21
        %p175 = scmp.lt.s32.totalorder %s174, 63
        %s176 = scalar_select %p175, %s174, 63
        %s177 = smul.addr %s176, 8
        %s178 = scalar_lea.vmem %s0, %s177
        %s179 = smul.u32 32, %s21
        %v180 = vld [vmem:[%s178] sm:$0xff]
        %v181 = vld [vmem:[%s178 + $0x8] sm:$0xff]
        %v182 = vld [vmem:[%s178 + $0x10] sm:$0xff]
        %v183 = vld [vmem:[%s178 + $0x18] sm:$0xff]
        %v184 = vld [vmem:[%s178 + $0x20] sm:$0xff]
        %v185 = vld [vmem:[%s178 + $0x28] sm:$0xff]
        %v186 = vld [vmem:[%s178 + $0x30] sm:$0xff]
        %v187 = vld [vmem:[%s178 + $0x38] sm:$0xff]
        %v188 = vld [vmem:[%s178 + $0x40] sm:$0xff]
        %v189 = vld [vmem:[%s178 + $0x48] sm:$0xff]
        %v190 = vld [vmem:[%s178 + $0x50] sm:$0xff]
        %v191 = vld [vmem:[%s178 + $0x58] sm:$0xff]
        %v192 = vld [vmem:[%s178 + $0x60] sm:$0xff]
        %v193 = vld [vmem:[%s178 + $0x68] sm:$0xff]
        %v194 = vld [vmem:[%s178 + $0x70] sm:$0xff]
        %v195 = vld [vmem:[%s178 + $0x78] sm:$0xff]
        %v196 = vld [vmem:[%s178 + $0x80] sm:$0xff]
        %v197 = vld [vmem:[%s178 + $0x88] sm:$0xff]
        %v198 = vld [vmem:[%s178 + $0x90] sm:$0xff]
        %v199 = vld [vmem:[%s178 + $0x98] sm:$0xff]
        %v200 = vld [vmem:[%s178 + $0xa0] sm:$0xff]
        %v201 = vld [vmem:[%s178 + $0xa8] sm:$0xff]
        %v202 = vld [vmem:[%s178 + $0xb0] sm:$0xff]
        %v203 = vld [vmem:[%s178 + $0xb8] sm:$0xff]
        %v204 = vld [vmem:[%s178 + $0xc0] sm:$0xff]
        %v205 = vld [vmem:[%s178 + $0xc8] sm:$0xff]
        %v206 = vld [vmem:[%s178 + $0xd0] sm:$0xff]
        %v207 = vld [vmem:[%s178 + $0xd8] sm:$0xff]
        %v208 = vld [vmem:[%s178 + $0xe0] sm:$0xff]
        %v209 = vld [vmem:[%s178 + $0xe8] sm:$0xff]
        %v210 = vld [vmem:[%s178 + $0xf0] sm:$0xff]
        %v211 = vld [vmem:[%s178 + $0xf8] sm:$0xff]
        %v212 = vld [vmem:[%s1] sm:$0xff]
        %v213 = vld [vmem:[%s1 + $0x8] sm:$0xff]
        %v214 = vld [vmem:[%s1 + $0x10] sm:$0xff]
        %v215 = vld [vmem:[%s1 + $0x18] sm:$0xff]
        %v216 = vld [vmem:[%s1 + $0x20] sm:$0xff]
        %vm217 = vcmask 326656
        %v219 = vsel %vm217, %v180, 0
        %v222 = vsel %vm217, %v181, 0
        %v225 = vsel %vm217, %v182, 0
        %v228 = vsel %vm217, %v183, 0
        %v231 = vsel %vm217, %v184, 0
        %v234 = vsel %vm217, %v185, 0
        %v237 = vsel %vm217, %v186, 0
        %v240 = vsel %vm217, %v187, 0
        %v243 = vsel %vm217, %v188, 0
        %v246 = vsel %vm217, %v189, 0
        %v249 = vsel %vm217, %v190, 0
        %v252 = vsel %vm217, %v191, 0
        %v255 = vsel %vm217, %v192, 0
        %v258 = vsel %vm217, %v193, 0
        %v261 = vsel %vm217, %v194, 0
        %v264 = vsel %vm217, %v195, 0
        %v267 = vsel %vm217, %v196, 0
        %v270 = vsel %vm217, %v197, 0
        %v273 = vsel %vm217, %v198, 0
        %v276 = vsel %vm217, %v199, 0
        %v279 = vsel %vm217, %v200, 0
        %v282 = vsel %vm217, %v201, 0
        %v285 = vsel %vm217, %v202, 0
        %v288 = vsel %vm217, %v203, 0
        %v291 = vsel %vm217, %v204, 0
        %v294 = vsel %vm217, %v205, 0
        %v297 = vsel %vm217, %v206, 0
        %v300 = vsel %vm217, %v207, 0
        %v303 = vsel %vm217, %v208, 0
        %v306 = vsel %vm217, %v209, 0
        %v309 = vsel %vm217, %v210, 0
        %v312 = vsel %vm217, %v211, 0
        %314 = vmatprep.subr.mxu0 0.0
        %315 = vmatpush1.msra.mxu0 %v212
        %316 = vmatprep.subr.mxu0 0.0
        %317 = vmatpush1.msra.mxu0 %v213
        %318 = vmatprep.subr.mxu0 0.0
        %319 = vmatpush1.msra.mxu0 %v214
        %320 = vmatprep.subr.mxu0 0.0
        %321 = vmatpush1.msra.mxu0 %v215
        %322 = vmatprep.subr.mxu0 0.0
        %323 = vmatpush1.msra.mxu0 %v216
        %324 = vmatprep.subr.mxu0 0.0
        %325 = vmatpush1.msra.mxu0 0.0
        %326 = vmatprep.subr.mxu0 0.0
        %327 = vmatpush1.msra.mxu0 0.0
        %328 = vmatprep.subr.mxu0 0.0
        %329 = vmatpush1.msra.mxu0 0.0
        %330 = vmatprep.subr.mxu0 0.0
        %331 = vmatpush1.msra.mxu0 0.0
        %332 = vmatprep.subr.mxu0 0.0
        %333 = vmatpush1.msra.mxu0 0.0
        %334 = vmatprep.subr.mxu0 0.0
        %335 = vmatpush1.msra.mxu0 0.0
        %336 = vmatprep.subr.mxu0 0.0
        %337 = vmatpush1.msra.mxu0 0.0
        %338 = vmatprep.subr.mxu0 0.0
        %339 = vmatpush1.msra.mxu0 0.0
        %340 = vmatprep.subr.mxu0 0.0
        %341 = vmatpush1.msra.mxu0 0.0
        %342 = vmatprep.subr.mxu0 0.0
        %343 = vmatpush1.msra.mxu0 0.0
        %344 = vmatprep.subr.mxu0 0.0
        %345 = vmatpush1.msra.mxu0 0.0
        %346 = vmatprep.subr.mxu0 0.0
        %347 = vmatpush1.msra.mxu0 0.0
        %348 = vmatprep.subr.mxu0 0.0
        %349 = vmatpush1.msra.mxu0 0.0
        %350 = vmatprep.subr.mxu0 0.0
        %351 = vmatpush1.msra.mxu0 0.0
        %352 = vmatprep.subr.mxu0 0.0
        %353 = vmatpush1.msra.mxu0 0.0
        %354 = vmatprep.subr.mxu0 0.0
        %355 = vmatpush1.msra.mxu0 0.0
        %356 = vmatprep.subr.mxu0 0.0
        %357 = vmatpush1.msra.mxu0 0.0
        %358 = vmatprep.subr.mxu0 0.0
        %359 = vmatpush1.msra.mxu0 0.0
        %360 = vmatprep.subr.mxu0 0.0
        %361 = vmatpush1.msra.mxu0 0.0
        %362 = vmatprep.subr.mxu0 0.0
        %363 = vmatpush1.msra.mxu0 0.0
        %364 = vmatprep.subr.mxu0 0.0
        %365 = vmatpush1.msra.mxu0 0.0
        %366 = vmatprep.subr.mxu0 0.0
        %367 = vmatpush1.msra.mxu0 0.0
        %368 = vmatprep.subr.mxu0 0.0
        %369 = vmatpush1.msra.mxu0 0.0
        %370 = vmatprep.subr.mxu0 0.0
        %371 = vmatpush1.msra.mxu0 0.0
        %372 = vmatprep.subr.mxu0 0.0
        %373 = vmatpush1.msra.mxu0 0.0
        %374 = vmatprep.subr.mxu0 0.0
        %375 = vmatpush1.msra.mxu0 0.0
        %376 = vmatprep.subr.mxu0 0.0
        %377 = vmatpush1.msra.mxu0 0.0
        %378 = vmatprep.mubr.f32.mxu0 0.0
        %379 = vmatmul.mubr.f32.gmra.mrb[0].mxu0 %v219
        %v380 = vpop.f32.mrb[0].mxu0
        %v381 = vadd.f32 0.0, %v380
        %v382 = vpop.f32.mrb[0].mxu0
        %383 = vmatprep.mubr.f32.mxu0 0.0
        %384 = vmatmul.mubr.f32.gmra.mrb[0].mxu0 %v222
        %v385 = vpop.f32.mrb[0].mxu0
        %v386 = vadd.f32 0.0, %v385
        %v387 = vpop.f32.mrb[0].mxu0
        %388 = vmatprep.mubr.f32.mxu0 0.0
        %389 = vmatmul.mubr.f32.gmra.mrb[0].mxu0 %v225
        %v390 = vpop.f32.mrb[0].mxu0
        %v391 = vadd.f32 0.0, %v390
        %v392 = vpop.f32.mrb[0].mxu0
        %393 = vmatprep.mubr.f32.mxu0 0.0
        %394 = vmatmul.mubr.f32.gmra.mrb[0].mxu0 %v228
        %v395 = vpop.f32.mrb[0].mxu0
        %v396 = vadd.f32 0.0, %v395
        %v397 = vpop.f32.mrb[0].mxu0
        %398 = vmatprep.mubr.f32.mxu0 0.0
        %399 = vmatmul.mubr.f32.gmra.mrb[0].mxu0 %v231
        %v400 = vpop.f32.mrb[0].mxu0
        %v401 = vadd.f32 0.0, %v400
        %v402 = vpop.f32.mrb[0].mxu0
        %403 = vmatprep.mubr.f32.mxu0 0.0
        %404 = vmatmul.mubr.f32.gmra.mrb[0].mxu0 %v234
        %v405 = vpop.f32.mrb[0].mxu0
        %v406 = vadd.f32 0.0, %v405
        %v407 = vpop.f32.mrb[0].mxu0
        %408 = vmatprep.mubr.f32.mxu0 0.0
        %409 = vmatmul.mubr.f32.gmra.mrb[0].mxu0 %v237
        %v410 = vpop.f32.mrb[0].mxu0
        %v411 = vadd.f32 0.0, %v410
        %v412 = vpop.f32.mrb[0].mxu0
        %413 = vmatprep.mubr.f32.mxu0 0.0
        %414 = vmatmul.mubr.f32.gmra.mrb[0].mxu0 %v240
        %v415 = vpop.f32.mrb[0].mxu0
        %v416 = vadd.f32 0.0, %v415
        %v417 = vpop.f32.mrb[0].mxu0
        %418 = vmatprep.mubr.f32.mxu0 0.0
        %419 = vmatmul.mubr.f32.gmra.mrb[0].mxu0 %v243
        %v420 = vpop.f32.mrb[0].mxu0
        %v421 = vadd.f32 0.0, %v420
        %v422 = vpop.f32.mrb[0].mxu0
        %423 = vmatprep.mubr.f32.mxu0 0.0
        %424 = vmatmul.mubr.f32.gmra.mrb[0].mxu0 %v246
        %v425 = vpop.f32.mrb[0].mxu0
        %v426 = vadd.f32 0.0, %v425
        %v427 = vpop.f32.mrb[0].mxu0
        %428 = vmatprep.mubr.f32.mxu0 0.0
        %429 = vmatmul.mubr.f32.gmra.mrb[0].mxu0 %v249
        %v430 = vpop.f32.mrb[0].mxu0
        %v431 = vadd.f32 0.0, %v430
        %v432 = vpop.f32.mrb[0].mxu0
        %433 = vmatprep.mubr.f32.mxu0 0.0
        %434 = vmatmul.mubr.f32.gmra.mrb[0].mxu0 %v252
        %v435 = vpop.f32.mrb[0].mxu0
        %v436 = vadd.f32 0.0, %v435
        %v437 = vpop.f32.mrb[0].mxu0
        %438 = vmatprep.mubr.f32.mxu0 0.0
        %439 = vmatmul.mubr.f32.gmra.mrb[0].mxu0 %v255
        %v440 = vpop.f32.mrb[0].mxu0
        %v441 = vadd.f32 0.0, %v440
        %v442 = vpop.f32.mrb[0].mxu0
        %443 = vmatprep.mubr.f32.mxu0 0.0
        %444 = vmatmul.mubr.f32.gmra.mrb[0].mxu0 %v258
        %v445 = vpop.f32.mrb[0].mxu0
        %v446 = vadd.f32 0.0, %v445
        %v447 = vpop.f32.mrb[0].mxu0
        %448 = vmatprep.mubr.f32.mxu0 0.0
        %449 = vmatmul.mubr.f32.gmra.mrb[0].mxu0 %v261
        %v450 = vpop.f32.mrb[0].mxu0
        %v451 = vadd.f32 0.0, %v450
        %v452 = vpop.f32.mrb[0].mxu0
        %453 = vmatprep.mubr.f32.mxu0 0.0
        %454 = vmatmul.mubr.f32.gmra.mrb[0].mxu0 %v264
        %v455 = vpop.f32.mrb[0].mxu0
        %v456 = vadd.f32 0.0, %v455
        %v457 = vpop.f32.mrb[0].mxu0
        %458 = vmatprep.mubr.f32.mxu0 0.0
        %459 = vmatmul.mubr.f32.gmra.mrb[0].mxu0 %v267
        %v460 = vpop.f32.mrb[0].mxu0
        %v461 = vadd.f32 0.0, %v460
        %v462 = vpop.f32.mrb[0].mxu0
        %463 = vmatprep.mubr.f32.mxu0 0.0
        %464 = vmatmul.mubr.f32.gmra.mrb[0].mxu0 %v270
        %v465 = vpop.f32.mrb[0].mxu0
        %v466 = vadd.f32 0.0, %v465
        %v467 = vpop.f32.mrb[0].mxu0
        %468 = vmatprep.mubr.f32.mxu0 0.0
        %469 = vmatmul.mubr.f32.gmra.mrb[0].mxu0 %v273
        %v470 = vpop.f32.mrb[0].mxu0
        %v471 = vadd.f32 0.0, %v470
        %v472 = vpop.f32.mrb[0].mxu0
        %473 = vmatprep.mubr.f32.mxu0 0.0
        %474 = vmatmul.mubr.f32.gmra.mrb[0].mxu0 %v276
        %v475 = vpop.f32.mrb[0].mxu0
        %v476 = vadd.f32 0.0, %v475
        %v477 = vpop.f32.mrb[0].mxu0
        %478 = vmatprep.mubr.f32.mxu0 0.0
        %479 = vmatmul.mubr.f32.gmra.mrb[0].mxu0 %v279
        %v480 = vpop.f32.mrb[0].mxu0
        %v481 = vadd.f32 0.0, %v480
        %v482 = vpop.f32.mrb[0].mxu0
        %483 = vmatprep.mubr.f32.mxu0 0.0
        %484 = vmatmul.mubr.f32.gmra.mrb[0].mxu0 %v282
        %v485 = vpop.f32.mrb[0].mxu0
        %v486 = vadd.f32 0.0, %v485
        %v487 = vpop.f32.mrb[0].mxu0
        %488 = vmatprep.mubr.f32.mxu0 0.0
        %489 = vmatmul.mubr.f32.gmra.mrb[0].mxu0 %v285
        %v490 = vpop.f32.mrb[0].mxu0
        %v491 = vadd.f32 0.0, %v490
        %v492 = vpop.f32.mrb[0].mxu0
        %493 = vmatprep.mubr.f32.mxu0 0.0
        %494 = vmatmul.mubr.f32.gmra.mrb[0].mxu0 %v288
        %v495 = vpop.f32.mrb[0].mxu0
        %v496 = vadd.f32 0.0, %v495
        %v497 = vpop.f32.mrb[0].mxu0
        %498 = vmatprep.mubr.f32.mxu0 0.0
        %499 = vmatmul.mubr.f32.gmra.mrb[0].mxu0 %v291
        %v500 = vpop.f32.mrb[0].mxu0
        %v501 = vadd.f32 0.0, %v500
        %v502 = vpop.f32.mrb[0].mxu0
        %503 = vmatprep.mubr.f32.mxu0 0.0
        %504 = vmatmul.mubr.f32.gmra.mrb[0].mxu0 %v294
        %v505 = vpop.f32.mrb[0].mxu0
        %v506 = vadd.f32 0.0, %v505
        %v507 = vpop.f32.mrb[0].mxu0
        %508 = vmatprep.mubr.f32.mxu0 0.0
        %509 = vmatmul.mubr.f32.gmra.mrb[0].mxu0 %v297
        %v510 = vpop.f32.mrb[0].mxu0
        %v511 = vadd.f32 0.0, %v510
        %v512 = vpop.f32.mrb[0].mxu0
        %513 = vmatprep.mubr.f32.mxu0 0.0
        %514 = vmatmul.mubr.f32.gmra.mrb[0].mxu0 %v300
        %v515 = vpop.f32.mrb[0].mxu0
        %v516 = vadd.f32 0.0, %v515
        %v517 = vpop.f32.mrb[0].mxu0
        %518 = vmatprep.mubr.f32.mxu0 0.0
        %519 = vmatmul.mubr.f32.gmra.mrb[0].mxu0 %v303
        %v520 = vpop.f32.mrb[0].mxu0
        %v521 = vadd.f32 0.0, %v520
        %v522 = vpop.f32.mrb[0].mxu0
        %523 = vmatprep.mubr.f32.mxu0 0.0
        %524 = vmatmul.mubr.f32.gmra.mrb[0].mxu0 %v306
        %v525 = vpop.f32.mrb[0].mxu0
        %v526 = vadd.f32 0.0, %v525
        %v527 = vpop.f32.mrb[0].mxu0
        %528 = vmatprep.mubr.f32.mxu0 0.0
        %529 = vmatmul.mubr.f32.gmra.mrb[0].mxu0 %v309
        %v530 = vpop.f32.mrb[0].mxu0
        %v531 = vadd.f32 0.0, %v530
        %v532 = vpop.f32.mrb[0].mxu0
        %533 = vmatprep.mubr.f32.mxu0 0.0
        %534 = vmatmul.mubr.f32.gmra.mrb[0].mxu0 %v312
        %v535 = vpop.f32.mrb[0].mxu0
        %v536 = vadd.f32 0.0, %v535
        %v537 = vpop.f32.mrb[0].mxu0
        %538 = vdwg.mxu0
        %v539 = vadd.f32 %v381, %v386
        %v540 = vadd.f32 %v539, %v391
        %v541 = vadd.f32 %v540, %v396
        %v542 = vadd.f32 %v541, %v401
        %v543 = vadd.f32 %v542, %v406
        %v544 = vadd.f32 %v543, %v411
        %v545 = vadd.f32 %v544, %v416
        %v546 = vadd.f32 %v545, %v421
        %v547 = vadd.f32 %v546, %v426
        %v548 = vadd.f32 %v547, %v431
        %v549 = vadd.f32 %v548, %v436
        %v550 = vadd.f32 %v549, %v441
        %v551 = vadd.f32 %v550, %v446
        %v552 = vadd.f32 %v551, %v451
        %v553 = vadd.f32 %v552, %v456
        %v554 = vadd.f32 %v553, %v461
        %v555 = vadd.f32 %v554, %v466
        %v556 = vadd.f32 %v555, %v471
        %v557 = vadd.f32 %v556, %v476
        %v558 = vadd.f32 %v557, %v481
        %v559 = vadd.f32 %v558, %v486
        %v560 = vadd.f32 %v559, %v491
        %v561 = vadd.f32 %v560, %v496
        %v562 = vadd.f32 %v561, %v501
        %v563 = vadd.f32 %v562, %v506
        %v564 = vadd.f32 %v563, %v511
        %v565 = vadd.f32 %v564, %v516
        %v566 = vadd.f32 %v565, %v521
        %v567 = vadd.f32 %v566, %v526
        %v568 = vadd.f32 %v567, %v531
        %v569 = vadd.f32 %v568, %v536
        %v570 = vrot.slane %v569, 4
        %v571 = vadd.f32 %v569, %v570
        %v572 = vrot.slane %v571, 2
        %v573 = vadd.f32 %v571, %v572
        %v574 = vrot.slane %v573, 1
        %v575 = vadd.f32 %v573, %v574
        %v576 = vmul.f32 %v381, %v381
        %v577 = vmul.f32 %v386, %v386
        %v578 = vmul.f32 %v391, %v391
        %v579 = vmul.f32 %v396, %v396
        %v580 = vmul.f32 %v401, %v401
        %v581 = vmul.f32 %v406, %v406
        %v582 = vmul.f32 %v411, %v411
        %v583 = vmul.f32 %v416, %v416
        %v584 = vmul.f32 %v421, %v421
        %v585 = vmul.f32 %v426, %v426
        %v586 = vmul.f32 %v431, %v431
        %v587 = vmul.f32 %v436, %v436
        %v588 = vmul.f32 %v441, %v441
        %v589 = vmul.f32 %v446, %v446
        %v590 = vmul.f32 %v451, %v451
        %v591 = vmul.f32 %v456, %v456
        %v592 = vmul.f32 %v461, %v461
        %v593 = vmul.f32 %v466, %v466
        %v594 = vmul.f32 %v471, %v471
        %v595 = vmul.f32 %v476, %v476
        %v596 = vmul.f32 %v481, %v481
        %v597 = vmul.f32 %v486, %v486
        %v598 = vmul.f32 %v491, %v491
        %v599 = vmul.f32 %v496, %v496
        %v600 = vmul.f32 %v501, %v501
        %v601 = vmul.f32 %v506, %v506
        %v602 = vmul.f32 %v511, %v511
        %v603 = vmul.f32 %v516, %v516
        %v604 = vmul.f32 %v521, %v521
        %v605 = vmul.f32 %v526, %v526
        %v606 = vmul.f32 %v531, %v531
        %v607 = vmul.f32 %v536, %v536
        %v608 = vadd.f32 %v576, %v577
        %v609 = vadd.f32 %v608, %v578
        %v610 = vadd.f32 %v609, %v579
        %v611 = vadd.f32 %v610, %v580
        %v612 = vadd.f32 %v611, %v581
        %v613 = vadd.f32 %v612, %v582
        %v614 = vadd.f32 %v613, %v583
        %v615 = vadd.f32 %v614, %v584
        %v616 = vadd.f32 %v615, %v585
        %v617 = vadd.f32 %v616, %v586
        %v618 = vadd.f32 %v617, %v587
        %v619 = vadd.f32 %v618, %v588
        %v620 = vadd.f32 %v619, %v589
        %v621 = vadd.f32 %v620, %v590
        %v622 = vadd.f32 %v621, %v591
        %v623 = vadd.f32 %v622, %v592
        %v624 = vadd.f32 %v623, %v593
        %v625 = vadd.f32 %v624, %v594
        %v626 = vadd.f32 %v625, %v595
        %v627 = vadd.f32 %v626, %v596
        %v628 = vadd.f32 %v627, %v597
        %v629 = vadd.f32 %v628, %v598
        %v630 = vadd.f32 %v629, %v599
        %v631 = vadd.f32 %v630, %v600
        %v632 = vadd.f32 %v631, %v601
        %v633 = vadd.f32 %v632, %v602
        %v634 = vadd.f32 %v633, %v603
        %v635 = vadd.f32 %v634, %v604
        %v636 = vadd.f32 %v635, %v605
        %v637 = vadd.f32 %v636, %v606
        %v638 = vadd.f32 %v637, %v607
        %v639 = vrot.slane %v638, 4
        %v640 = vadd.f32 %v638, %v639
        %v641 = vrot.slane %v640, 2
        %v642 = vadd.f32 %v640, %v641
        %v643 = vrot.slane %v642, 1
        %v644 = vadd.f32 %v642, %v643
        %645 = vst [vmem:[%s167] sm:$0x1] %v575
        %646 = vst [vmem:[%s173] sm:$0x1] %v644
        %s647 = sand.u32 %s76, 1
        %s648 = scalar_lea.sflag [#allocation3], %s647
        %s649 = sand.u32 %s76, 1
        %s650 = scalar_lea.vmem [#allocation2], %s649
        %s651 = sand.u32 %s102, 1
        %s652 = scalar_lea.sflag [#allocation5], %s651
        %s653 = sand.u32 %s102, 1
        %s654 = scalar_lea.vmem [#allocation4], %s653
        // Predicated region
        $region29: #{tpu_custom_call.1} parent=27 // pred_check
          %p655 = pneg %p86
        $region30: #{tpu_custom_call.1} parent=27 // pred_check_branch
          %657 = sbr.rel (%p655) target = $region32
        $region31: #{tpu_custom_call.1} parent=27 // pred_region
          %s659 = ssub.s32 16, 16
          %660 = vsyncadd %s648, %s659
          %s661 = smul.addr %s21, 16
          %s662 = scalar_lea.hbm %s2, %s661
          %s664 = sshll.u32 %s650, 4
          %s665 = int_to_ptr.vmem [resolvable:$true] %s664
          %667 = dma.vmem_to_hbm [thread:$0]  %s665, 16, %s662, %s648
        $region32: #{tpu_custom_call.1} parent=27 // pred_fallthru
          _
        // Predicated region
        $region33: #{tpu_custom_call.1} parent=27 // pred_check
          %p668 = pneg %p112
        $region34: #{tpu_custom_call.1} parent=27 // pred_check_branch
          %670 = sbr.rel (%p668) target = $region36
        $region35: #{tpu_custom_call.1} parent=27 // pred_region
          %s672 = ssub.s32 16, 16
          %673 = vsyncadd %s652, %s672
          %s674 = smul.addr %s21, 16
          %s675 = scalar_lea.hbm %s3, %s674
          %s677 = sshll.u32 %s654, 4
          %s678 = int_to_ptr.vmem [resolvable:$true] %s677
          %680 = dma.vmem_to_hbm [thread:$0]  %s678, 16, %s675, %s652
        $region36: #{tpu_custom_call.1} parent=27 // pred_fallthru
          _
      $region28: #{tpu_custom_call.1} parent=5 // pred_fallthru
        _
      %p681 = scmp.le.s32.totalorder 2, %s16
      // Predicated region
      $region37: #{tpu_custom_call.1} parent=5 // pred_check
        %p682 = pneg %p681
      $region38: #{tpu_custom_call.1} parent=5 // pred_check_branch
        %684 = sbr.rel (%p682) target = $region40
      $region39: #{tpu_custom_call.1} parent=5 // pred_region
        %s685 = ssub.s32 %s16, 2
        // Predicated region
        $region41: #{tpu_custom_call.1} parent=39 // pred_check
          %p686 = pneg %p92
        $region42: #{tpu_custom_call.1} parent=39 // pred_check_branch
          %688 = sbr.rel (%p686) target = $region44
        $region43: #{tpu_custom_call.1} parent=39 // pred_region
          %s689 = sand.u32 %s77, 1
          %s690 = scalar_lea.sflag [#allocation3], %s689
          %s691 = sand.u32 %s77, 1
          %s692 = scalar_lea.vmem [#allocation2], %s691
          %693 = dma.done %s690, 16
        $region44: #{tpu_custom_call.1} parent=39 // pred_fallthru
          _
        // Predicated region
        $region45: #{tpu_custom_call.1} parent=39 // pred_check
          %p694 = pneg %p118
        $region46: #{tpu_custom_call.1} parent=39 // pred_check_branch
          %696 = sbr.rel (%p694) target = $region48
        $region47: #{tpu_custom_call.1} parent=39 // pred_region
          %s697 = sand.u32 %s103, 1
          %s698 = scalar_lea.sflag [#allocation5], %s697
          %s699 = sand.u32 %s103, 1
          %s700 = scalar_lea.vmem [#allocation4], %s699
          %701 = dma.done %s698, 16
        $region48: #{tpu_custom_call.1} parent=39 // pred_fallthru
          _
      $region40: #{tpu_custom_call.1} parent=5 // pred_fallthru
        _
    $region6: #{tpu_custom_call.1} parent=1 // loop_footer
      %s20 = sadd.s32 1, %s16
    $region7: #{tpu_custom_call.1} parent=1 // loop_footer_branch
      %15 = sbr.rel target = $region3
    $region8: #{tpu_custom_call.1} parent=1 // loop_exit
      _
    %702 = vsyncpa [#allocation3], 1
    %s703 = scalar_lea.sflag [#allocation3], 1
    %704 = vsyncpa %s703, 1
    %705 = vsyncpa [#allocation5], 1
    %s706 = scalar_lea.sflag [#allocation5], 1
    %707 = vsyncpa %s706, 1

</llo_original>
